<compile_context>
chip_gen: v6e
topology: v6e:2x2x1
jax: 0.10.0
libtpu: 0.0.40
codegen_flags: <defaults>
</compile_context>

<pallas_src>
import functools

import jax
import jax.numpy as jnp
from jax import lax
from jax.experimental import pallas as pl
from jax.experimental.pallas import tpu as pltpu


# ----------------------------------------------------------------------------
# Fused kernel: LayerNorm(4C) + Linear(4C -> 2C, bias=False)
# ----------------------------------------------------------------------------
def _patch_merging_kernel(x_ref, gamma_ref, beta_ref, w_ref, o_ref, *, eps):
    # x_ref:     (TM, K)  merged-patch features for this row tile
    # gamma_ref: (1, K)   LayerNorm weight
    # beta_ref:  (1, K)   LayerNorm bias
    # w_ref:     (K, N)   reduction weight (stored input-major: y = x @ W)
    # o_ref:     (TM, N)
    x = x_ref[...].astype(jnp.float32)
    mean = jnp.mean(x, axis=-1, keepdims=True)
    xc = x - mean
    var = jnp.mean(xc * xc, axis=-1, keepdims=True)          # biased var (PyTorch LN)
    inv = lax.rsqrt(var + eps)
    y = xc * inv * gamma_ref[...] + beta_ref[...]             # (TM, K), VPU epilogue
    o_ref[...] = jnp.dot(
        y, w_ref[...], preferred_element_type=jnp.float32
    ).astype(o_ref.dtype)


def _round_up(x, m):
    return ((x + m - 1) // m) * m


def patch_merging_forward(x, H, W, ln_gamma, ln_beta, w_reduction,
                          *, block_rows=64, eps=1e-5):
    """PatchMerging forward. x: (B, H*W, C). Returns (B, ceil(H/2)*ceil(W/2), 2C)."""
    B, L, C = x.shape
    assert L == H * W, "input feature has wrong size"

    # ---- layout plumbing (pure data movement, no compute) in the wrapper ----
    xv = x.reshape(B, H, W, C)
    if (H % 2 == 1) or (W % 2 == 1):
        xv = jnp.pad(xv, ((0, 0), (0, H % 2), (0, W % 2), (0, 0)))
    Hp, Wp = xv.shape[1], xv.shape[2]
    x0 = xv[:, 0::2, 0::2, :]
    x1 = xv[:, 1::2, 0::2, :]
    x2 = xv[:, 0::2, 1::2, :]
    x3 = xv[:, 1::2, 1::2, :]
    xm = jnp.concatenate([x0, x1, x2, x3], axis=-1)           # (B, Hp/2, Wp/2, 4C)

    Ho, Wo = Hp // 2, Wp // 2
    M, K, N = B * Ho * Wo, 4 * C, 2 * C
    xm = xm.reshape(M, K)

    # Tile rows; pad M up to a multiple of the row tile (multiple of 8 sublanes).
    tm = min(block_rows, _round_up(M, 8))
    Mp = _round_up(M, tm)
    if Mp != M:
        xm = jnp.pad(xm, ((0, Mp - M), (0, 0)))

    out = pl.pallas_call(
        functools.partial(_patch_merging_kernel, eps=eps),
        out_shape=jax.ShapeDtypeStruct((Mp, N), x.dtype),
        grid=(Mp // tm,),
        in_specs=[
            pl.BlockSpec((tm, K), lambda i: (i, 0)),          # merged tokens (tiled)
            pl.BlockSpec((1, K), lambda i: (0, 0)),           # LN weight (resident)
            pl.BlockSpec((1, K), lambda i: (0, 0)),           # LN bias   (resident)
            pl.BlockSpec((K, N), lambda i: (0, 0)),           # reduction weight
        ],
        out_specs=pl.BlockSpec((tm, N), lambda i: (i, 0)),
        compiler_params=pltpu.CompilerParams(
            dimension_semantics=("parallel",)),
    )(xm, ln_gamma.reshape(1, K), ln_beta.reshape(1, K), w_reduction)

    return out[:M].reshape(B, Ho * Wo, N)


# ----------------------------------------------------------------------------
# Pure-JAX reference (mirrors the PyTorch module exactly)
# ----------------------------------------------------------------------------
def patch_merging_reference(x, H, W, ln_gamma, ln_beta, w_reduction, eps=1e-5):
    B, L, C = x.shape
    xv = x.reshape(B, H, W, C)
    if (H % 2 == 1) or (W % 2 == 1):
        xv = jnp.pad(xv, ((0, 0), (0, H % 2), (0, W % 2), (0, 0)))
    x0 = xv[:, 0::2, 0::2, :]
    x1 = xv[:, 1::2, 0::2, :]
    x2 = xv[:, 0::2, 1::2, :]
    x3 = xv[:, 1::2, 1::2, :]
    xm = jnp.concatenate([x0, x1, x2, x3], axis=-1).reshape(B, -1, 4 * C)
    mean = jnp.mean(xm, axis=-1, keepdims=True)
    var = jnp.mean((xm - mean) ** 2, axis=-1, keepdims=True)
    xn = (xm - mean) / jnp.sqrt(var + eps) * ln_gamma + ln_beta
    return xn @ w_reduction


if __name__ == "__main__":
    # Small shapes consistent with the module; odd H exercises the pad branch.
    B, H, W, dim = 2, 15, 16, 64          # x: (2, 240, 64); 4C=256, 2C=128 (lane-dense)

    key = jax.random.PRNGKey(0)
    kx, kg, kb, kw = jax.random.split(key, 4)

    x = jax.random.normal(kx, (B, H * W, dim), jnp.float32)
    ln_gamma = 1.0 + 0.1 * jax.random.normal(kg, (4 * dim,), jnp.float32)
    ln_beta = 0.1 * jax.random.normal(kb, (4 * dim,), jnp.float32)
    # nn.Linear(4*dim, 2*dim, bias=False): store weight transposed (in, out).
    bound = 1.0 / float(4 * dim) ** 0.5
    w_reduction = jax.random.uniform(kw, (4 * dim, 2 * dim), jnp.float32,
                                     -bound, bound)

    out = patch_merging_forward(x, H, W, ln_gamma, ln_beta, w_reduction)
    jax.block_until_ready(out)

    ref = patch_merging_reference(x, H, W, ln_gamma, ln_beta, w_reduction)

    Ho, Wo = (H + 1) // 2, (W + 1) // 2
    assert out.shape == (B, Ho * Wo, 2 * dim), out.shape
    assert bool(jnp.all(jnp.isfinite(out)))
    assert jnp.allclose(out, ref, atol=1e-4, rtol=1e-4), float(
        jnp.max(jnp.abs(out - ref)))
    print("KERNEL_OK")
</pallas_src>

<mosaic_0001>
module attributes {stable_mosaic.version = 11 : i64} {
  func.func @_patch_merging_kernel(%arg0: i32, %arg1: memref<64x256xf32, #tpu.memory_space<vmem>>, %arg2: memref<1x256xf32, #tpu.memory_space<vmem>>, %arg3: memref<1x256xf32, #tpu.memory_space<vmem>>, %arg4: memref<256x128xf32, #tpu.memory_space<vmem>>, %arg5: memref<64x128xf32, #tpu.memory_space<vmem>>) attributes {dimension_semantics = [#tpu.dimension_semantics<parallel>], iteration_bounds = array<i64: 2>, scalar_prefetch = 0 : i64, scratch_operands = 0 : i64, tpu.core_type = #tpu.core_type<tc>, window_params = [{transform_indices = @transform_0, window_bounds = array<i64: 64, 256>}, {pipeline_mode = #tpu.pipeline_mode<synchronous>, transform_indices = @transform_1, window_bounds = array<i64: 1, 256>}, {pipeline_mode = #tpu.pipeline_mode<synchronous>, transform_indices = @transform_2, window_bounds = array<i64: 1, 256>}, {pipeline_mode = #tpu.pipeline_mode<synchronous>, transform_indices = @transform_3, window_bounds = array<i64: 256, 128>}, {transform_indices = @transform_4, window_bounds = array<i64: 64, 128>}]} {
    %c0 = arith.constant 0 : index
    %c0_0 = arith.constant 0 : index
    %0 = vector.load %arg1[%c0, %c0_0] : memref<64x256xf32, #tpu.memory_space<vmem>>, vector<64x256xf32>
    %cst = arith.constant dense<0.000000e+00> : vector<64xf32>
    %1 = vector.multi_reduction <add>, %0, %cst [1] : vector<64x256xf32> to vector<64xf32>
    %2 = vector.shape_cast %1 : vector<64xf32> to vector<64x1xf32>
    %cst_1 = arith.constant 2.560000e+02 : f32
    %3 = vector.broadcast %cst_1 : f32 to vector<64x1xf32>
    %4 = arith.divf %2, %3 : vector<64x1xf32>
    %5 = vector.broadcast %4 : vector<64x1xf32> to vector<64x256xf32>
    %6 = arith.subf %0, %5 : vector<64x256xf32>
    %7 = arith.mulf %6, %6 : vector<64x256xf32>
    %cst_2 = arith.constant dense<0.000000e+00> : vector<64xf32>
    %8 = vector.multi_reduction <add>, %7, %cst_2 [1] : vector<64x256xf32> to vector<64xf32>
    %9 = vector.shape_cast %8 : vector<64xf32> to vector<64x1xf32>
    %cst_3 = arith.constant 2.560000e+02 : f32
    %10 = vector.broadcast %cst_3 : f32 to vector<64x1xf32>
    %11 = arith.divf %9, %10 : vector<64x1xf32>
    %cst_4 = arith.constant 9.99999974E-6 : f32
    %12 = vector.broadcast %cst_4 : f32 to vector<64x1xf32>
    %13 = arith.addf %11, %12 : vector<64x1xf32>
    %14 = math.rsqrt %13 : vector<64x1xf32>
    %15 = vector.broadcast %14 : vector<64x1xf32> to vector<64x256xf32>
    %16 = arith.mulf %6, %15 : vector<64x256xf32>
    %c0_5 = arith.constant 0 : index
    %c0_6 = arith.constant 0 : index
    %17 = vector.load %arg2[%c0_5, %c0_6] : memref<1x256xf32, #tpu.memory_space<vmem>>, vector<1x256xf32>
    %18 = vector.broadcast %17 : vector<1x256xf32> to vector<64x256xf32>
    %19 = arith.mulf %16, %18 : vector<64x256xf32>
    %c0_7 = arith.constant 0 : index
    %c0_8 = arith.constant 0 : index
    %20 = vector.load %arg3[%c0_7, %c0_8] : memref<1x256xf32, #tpu.memory_space<vmem>>, vector<1x256xf32>
    %21 = vector.broadcast %20 : vector<1x256xf32> to vector<64x256xf32>
    %22 = arith.addf %19, %21 : vector<64x256xf32>
    %c0_9 = arith.constant 0 : index
    %c0_10 = arith.constant 0 : index
    %23 = vector.load %arg4[%c0_9, %c0_10] : memref<256x128xf32, #tpu.memory_space<vmem>>, vector<256x128xf32>
    %cst_11 = arith.constant dense<0.000000e+00> : vector<64x128xf32>
    %24 = tpu.matmul %22, %23, %cst_11 {dimension_numbers = #tpu.dot_dimension_numbers<[1], [0], [0], [1], [0, 0, 1, 1], [], []>} : vector<64x256xf32>, vector<256x128xf32>, vector<64x128xf32> -> vector<64x128xf32>
    %c0_12 = arith.constant 0 : index
    %c0_13 = arith.constant 0 : index
    %25 = vector.load %arg5[%c0_12, %c0_13] : memref<64x128xf32, #tpu.memory_space<vmem>>, vector<64x128xf32>
    tpu.vector_store %arg5[%c0_12, %c0_13], %24 {strides = array<i32>} : memref<64x128xf32, #tpu.memory_space<vmem>>, vector<64x128xf32>,
    return
  }
  func.func @transform_0(%arg0: i32) -> (i32, i32) {
    %c0_i32 = arith.constant 0 : i32
    %c0_i32_0 = arith.constant 0 : i32
    return %arg0, %c0_i32 : i32, i32
  }
  func.func @transform_1(%arg0: i32) -> (i32, i32) {
    %c0_i32 = arith.constant 0 : i32
    %c0_i32_0 = arith.constant 0 : i32
    %c0_i32_1 = arith.constant 0 : i32
    return %c0_i32, %c0_i32_0 : i32, i32
  }
  func.func @transform_2(%arg0: i32) -> (i32, i32) {
    %c0_i32 = arith.constant 0 : i32
    %c0_i32_0 = arith.constant 0 : i32
    %c0_i32_1 = arith.constant 0 : i32
    return %c0_i32, %c0_i32_0 : i32, i32
  }
  func.func @transform_3(%arg0: i32) -> (i32, i32) {
    %c0_i32 = arith.constant 0 : i32
    %c0_i32_0 = arith.constant 0 : i32
    %c0_i32_1 = arith.constant 0 : i32
    return %c0_i32, %c0_i32_0 : i32, i32
  }
  func.func @transform_4(%arg0: i32) -> (i32, i32) {
    %c0_i32 = arith.constant 0 : i32
    %c0_i32_0 = arith.constant 0 : i32
    return %arg0, %c0_i32 : i32, i32
  }
}

</mosaic_0001>

<llo_original>
// kernel: tpu_custom_call.1
$region0: #{tpu_custom_call.1}
  #allocation0 [shape = 'u32[]', space=smem, size = 0x4, offset = 0x4, fixed_abs, tag = 'smem constant byte address 0x4 - core index']
  #allocation1 [shape = 'u32[144,128]{1,0:T(1,128)}', space=vmem, size = 0x12000, scoped, tag = 'internal scratch']
  %s0 = inlined_call_operand.hbm [shape: f32[128,256], index: 0, kind: input, shape index: {}]
  %s1 = inlined_call_operand.hbm [shape: f32[1,256], index: 1, kind: input, shape index: {}]
  %s2 = inlined_call_operand.vmem [shape: f32[1,256], index: 2, kind: input, shape index: {}]
  %s3 = inlined_call_operand.hbm [shape: f32[256,128], index: 3, kind: input, shape index: {}]
  %s4 = inlined_call_operand.hbm [shape: f32[128,128], index: 4, kind: output, shape index: {}]
  %s5 = sld [smem:[#allocation0]]
  $region61: #{tpu_custom_call.1} parent=0
    _
  %s7 = ssub.s32 1, %s5
  %s8 = scalar_select 0, %s7, %s5
  $region1: #{tpu_custom_call.1} parent=0
    #allocation2 [shape = 'u8[131072]{0}', space=vmem, size = 0x20000, scoped, tag = 'input window, operand 0']
    #allocation3 [shape = 's32[2]{0}', space=sflag, size = 0x8, scoped, tag = 'scoped memory for tpu_custom_call.1']
    #allocation4 [shape = 's32[2]{0}', space=sflag, size = 0x8, scoped, tag = 'scoped memory for tpu_custom_call.1']
    #allocation5 [shape = 'u8[1024]{0}', space=vmem, size = 0x400, scoped, tag = 'input window, operand 1, single buffered']
    #allocation6 [shape = 's32[1]{0}', space=sflag, size = 0x4, scoped, tag = 'scoped memory for tpu_custom_call.1']
    #allocation7 [shape = 'u8[131072]{0}', space=vmem, size = 0x20000, scoped, tag = 'input window, operand 3, single buffered']
    #allocation8 [shape = 'u8[65536]{0}', space=vmem, size = 0x10000, scoped, tag = 'output window, operand 0']
    %9 = vsyncpa [#allocation3], 0
    %s10 = scalar_lea.sflag [#allocation3], 1
    %11 = vsyncpa %s10, 0
    %12 = vsyncpa [#allocation6], 0
    %13 = vsyncpa [#allocation4], 0
    %s14 = scalar_lea.sflag [#allocation4], 1
    %15 = vsyncpa %s14, 0
    loop: start=0, step=1, limit=4
    $region2: #{tpu_custom_call.1} parent=1 // loop_pre_header
      _
    $region3: #{tpu_custom_call.1} parent=1 // loop_header
      %s17 = sphi 0, %s21
      %p18 = scmp.ge.s32.totalorder %s17, 4
      %s27 = sphi 0, %s29
      %s30 = sphi 0, %s27
      %s31 = sphi 0, %s30
      %s47 = sphi 0, %s31
      %s51 = sphi 0, %s51
      %s53 = sphi 0, %s51
      %s54 = sphi 0, %s53
      %s68 = sphi 0, %s54
      %s72 = sphi 0, %s72
      %s74 = sphi 0, %s72
      %s75 = sphi 0, %s74
      %s89 = sphi 0, %s75
      %s93 = sphi 0, %s93
      %s95 = sphi 0, %s93
      %s96 = sphi 0, %s95
      %s110 = sphi 0, %s96
      %s116 = sphi 0, %s118
      %s119 = sphi 0, %s116
      %s120 = sphi 0, %s119
      %s136 = sphi 0, %s120
    $region4: #{tpu_custom_call.1} parent=1 // loop_header_branch
      %20 = sbr.rel (%p18) target = $region8
    $region5: #{tpu_custom_call.1} parent=1 // loop_body
      %s22 = ssub.s32 %s17, 1
      %s23 = ssub.s32 %s17, 2
      %s24 = sadd.s32 %s17, 1
      %s25 = ssub.s32 %s17, %s24
      %p26 = scmp.eq.s32.totalorder %s25, 0
      %s28 = sadd.s32 %s27, 1
      %s29 = scalar_select %p26, %s27, %s28
      %p32 = pneg %p26
      %p33 = scmp.eq.s32.totalorder %s17, 1
      %p34 = por %p32, %p33
      %p35 = scmp.ne.s32.totalorder %s27, %s30
      %p36 = scmp.eq.s32.totalorder %s17, 0
      %p37 = por %p35, %p36
      %p38 = scmp.ne.s32.totalorder %s27, %s30
      %p39 = scmp.eq.s32.totalorder %s22, 1
      %p40 = por %p38, %p39
      %p41 = scmp.ne.s32.totalorder %s30, %s31
      %p42 = scmp.eq.s32.totalorder %s22, 0
      %p43 = por %p41, %p42
      %p44 = scmp.ne.s32.totalorder %s30, %s31
      %p45 = scmp.eq.s32.totalorder %s23, 1
      %p46 = por %p44, %p45
      %p48 = scmp.ne.s32.totalorder %s31, %s47
      %p49 = scmp.eq.s32.totalorder %s23, 0
      %p50 = por %p48, %p49
      %s52 = sadd.s32 %s51, 1
      %p55 = scmp.eq.s32.totalorder %s17, 1
      %p56 = scmp.ne.s32.totalorder %s51, %s53
      %p57 = scmp.eq.s32.totalorder %s17, 0
      %p58 = por %p56, %p57
      %p59 = scmp.ne.s32.totalorder %s51, %s53
      %p60 = scmp.eq.s32.totalorder %s22, 1
      %p61 = por %p59, %p60
      %p62 = scmp.ne.s32.totalorder %s53, %s54
      %p63 = scmp.eq.s32.totalorder %s22, 0
      %p64 = por %p62, %p63
      %p65 = scmp.ne.s32.totalorder %s53, %s54
      %p66 = scmp.eq.s32.totalorder %s23, 1
      %p67 = por %p65, %p66
      %p69 = scmp.ne.s32.totalorder %s54, %s68
      %p70 = scmp.eq.s32.totalorder %s23, 0
      %p71 = por %p69, %p70
      %s73 = sadd.s32 %s72, 1
      %p76 = scmp.eq.s32.totalorder %s17, 1
      %p77 = scmp.ne.s32.totalorder %s72, %s74
      %p78 = scmp.eq.s32.totalorder %s17, 0
      %p79 = por %p77, %p78
      %p80 = scmp.ne.s32.totalorder %s72, %s74
      %p81 = scmp.eq.s32.totalorder %s22, 1
      %p82 = por %p80, %p81
      %p83 = scmp.ne.s32.totalorder %s74, %s75
      %p84 = scmp.eq.s32.totalorder %s22, 0
      %p85 = por %p83, %p84
      %p86 = scmp.ne.s32.totalorder %s74, %s75
      %p87 = scmp.eq.s32.totalorder %s23, 1
      %p88 = por %p86, %p87
      %p90 = scmp.ne.s32.totalorder %s75, %s89
      %p91 = scmp.eq.s32.totalorder %s23, 0
      %p92 = por %p90, %p91
      %s94 = sadd.s32 %s93, 1
      %p97 = scmp.eq.s32.totalorder %s17, 1
      %p98 = scmp.ne.s32.totalorder %s93, %s95
      %p99 = scmp.eq.s32.totalorder %s17, 0
      %p100 = por %p98, %p99
      %p101 = scmp.ne.s32.totalorder %s93, %s95
      %p102 = scmp.eq.s32.totalorder %s22, 1
      %p103 = por %p101, %p102
      %p104 = scmp.ne.s32.totalorder %s95, %s96
      %p105 = scmp.eq.s32.totalorder %s22, 0
      %p106 = por %p104, %p105
      %p107 = scmp.ne.s32.totalorder %s95, %s96
      %p108 = scmp.eq.s32.totalorder %s23, 1
      %p109 = por %p107, %p108
      %p111 = scmp.ne.s32.totalorder %s96, %s110
      %p112 = scmp.eq.s32.totalorder %s23, 0
      %p113 = por %p111, %p112
      %s114 = ssub.s32 %s17, %s24
      %p115 = scmp.eq.s32.totalorder %s114, 0
      %s117 = sadd.s32 %s116, 1
      %s118 = scalar_select %p115, %s116, %s117
      %p121 = pneg %p115
      %p122 = scmp.eq.s32.totalorder %s17, 1
      %p123 = por %p121, %p122
      %p124 = scmp.ne.s32.totalorder %s116, %s119
      %p125 = scmp.eq.s32.totalorder %s17, 0
      %p126 = por %p124, %p125
      %p127 = scmp.ne.s32.totalorder %s116, %s119
      %p128 = scmp.eq.s32.totalorder %s22, 1
      %p129 = por %p127, %p128
      %p130 = scmp.ne.s32.totalorder %s119, %s120
      %p131 = scmp.eq.s32.totalorder %s22, 0
      %p132 = por %p130, %p131
      %p133 = scmp.ne.s32.totalorder %s119, %s120
      %p134 = scmp.eq.s32.totalorder %s23, 1
      %p135 = por %p133, %p134
      %p137 = scmp.ne.s32.totalorder %s120, %s136
      %p138 = scmp.eq.s32.totalorder %s23, 0
      %p139 = por %p137, %p138
      %p140 = scmp.le.s32.totalorder 1, %s17
      %p141 = scmp.lt.s32.totalorder %s17, 3
      %p142 = pnand %p140, %p141
      %p143 = pneg %p142
      // Predicated region
      $region9: #{tpu_custom_call.1} parent=5 // pred_check
        _
      $region10: #{tpu_custom_call.1} parent=5 // pred_check_branch
        %145 = sbr.rel (%p142) target = $region12
      $region11: #{tpu_custom_call.1} parent=5 // pred_region
        %s146 = ssub.s32 %s17, 1
        // Predicated region
        $region13: #{tpu_custom_call.1} parent=11 // pred_check
          %p147 = pneg %p64
        $region14: #{tpu_custom_call.1} parent=11 // pred_check_branch
          %149 = sbr.rel (%p147) target = $region16
        $region15: #{tpu_custom_call.1} parent=11 // pred_region
          %s151 = ssub.s32 32, 32
          %152 = vsyncadd [#allocation6], %s151
          %s154 = sshll.u32 [#allocation5], 4
          %s155 = int_to_ptr.vmem [resolvable:$true] %s154
          %157 = dma.hbm_to_vmem [thread:$0]  %s1, 32, %s155, [#allocation6]
        $region16: #{tpu_custom_call.1} parent=11 // pred_fallthru
          _
        // Predicated region
        $region17: #{tpu_custom_call.1} parent=11 // pred_check
          %p158 = pneg %p85
        $region18: #{tpu_custom_call.1} parent=11 // pred_check_branch
          %160 = sbr.rel (%p158) target = $region20
        $region19: #{tpu_custom_call.1} parent=11 // pred_region
          _
        $region20: #{tpu_custom_call.1} parent=11 // pred_fallthru
          _
        // Predicated region
        $region21: #{tpu_custom_call.1} parent=11 // pred_check
          %p161 = pneg %p106
        $region22: #{tpu_custom_call.1} parent=11 // pred_check_branch
          %163 = sbr.rel (%p161) target = $region24
        $region23: #{tpu_custom_call.1} parent=11 // pred_region
          %s165 = ssub.s32 4096, 4096
          %166 = vsyncadd [#allocation6], %s165
          %s167 = sshll.u32 [#allocation7], 4
          %s168 = int_to_ptr.vmem [resolvable:$true] %s167
          %173 = dma.hbm_to_vmem [thread:$0]  %s3, 4096, %s168, [#allocation6], 128, 128, 8
        $region24: #{tpu_custom_call.1} parent=11 // pred_fallthru
          _
      $region12: #{tpu_custom_call.1} parent=5 // pred_fallthru
        _
      %p174 = scmp.lt.s32.totalorder %s17, 2
      // Predicated region
      $region25: #{tpu_custom_call.1} parent=5 // pred_check
        %p175 = pneg %p174
      $region26: #{tpu_custom_call.1} parent=5 // pred_check_branch
        %177 = sbr.rel (%p175) target = $region28
      $region27: #{tpu_custom_call.1} parent=5 // pred_region
        // Predicated region
        $region29: #{tpu_custom_call.1} parent=27 // pred_check
          %p178 = pneg %p37
        $region30: #{tpu_custom_call.1} parent=27 // pred_check_branch
          %180 = sbr.rel (%p178) target = $region32
        $region31: #{tpu_custom_call.1} parent=27 // pred_region
          %s181 = sand.u32 %s27, 1
          %s182 = scalar_lea.sflag [#allocation3], %s181
          %s183 = sand.u32 %s27, 1
          %s184 = smul.addr %s183, 128
          %s185 = scalar_lea.vmem [#allocation2], %s184
          %s186 = smul.u32 8, %s17
          %s188 = ssub.s32 2048, 2048
          %189 = vsyncadd %s182, %s188
          %s190 = smul.addr %s186, 2
          %s191 = smul.addr %s190, 128
          %s192 = scalar_lea.hbm %s0, %s191
          %s193 = sshll.u32 %s185, 4
          %s194 = int_to_ptr.vmem [resolvable:$true] %s193
          %199 = dma.hbm_to_vmem [thread:$0]  %s192, 2048, %s194, %s182, 256, 256, 16
        $region32: #{tpu_custom_call.1} parent=27 // pred_fallthru
          _
      $region28: #{tpu_custom_call.1} parent=5 // pred_fallthru
        _
      %p200 = scmp.le.s32.totalorder 1, %s17
      %p201 = scmp.lt.s32.totalorder %s17, 3
      %p202 = pnand %p200, %p201
      %p203 = pneg %p202
      // Predicated region
      $region33: #{tpu_custom_call.1} parent=5 // pred_check
        _
      $region34: #{tpu_custom_call.1} parent=5 // pred_check_branch
        %205 = sbr.rel (%p202) target = $region36
      $region35: #{tpu_custom_call.1} parent=5 // pred_region
        %s206 = ssub.s32 %s17, 1
        %s207 = sand.u32 %s30, 1
        %s208 = scalar_lea.sflag [#allocation3], %s207
        %s209 = sand.u32 %s30, 1
        %s210 = smul.addr %s209, 128
        %s211 = scalar_lea.vmem [#allocation2], %s210
        // Predicated region
        $region37: #{tpu_custom_call.1} parent=35 // pred_check
          %p212 = pneg %p43
        $region38: #{tpu_custom_call.1} parent=35 // pred_check_branch
          %214 = sbr.rel (%p212) target = $region40
        $region39: #{tpu_custom_call.1} parent=35 // pred_region
          %215 = dma.done %s208, 2048
        $region40: #{tpu_custom_call.1} parent=35 // pred_fallthru
          _
        // Predicated region
        $region41: #{tpu_custom_call.1} parent=35 // pred_check
          %p216 = pneg %p64
        $region42: #{tpu_custom_call.1} parent=35 // pred_check_branch
          %218 = sbr.rel (%p216) target = $region44
        $region43: #{tpu_custom_call.1} parent=35 // pred_region
          %219 = dma.done [#allocation6], 32
        $region44: #{tpu_custom_call.1} parent=35 // pred_fallthru
          _
        // Predicated region
        $region45: #{tpu_custom_call.1} parent=35 // pred_check
          %p220 = pneg %p106
        $region46: #{tpu_custom_call.1} parent=35 // pred_check_branch
          %222 = sbr.rel (%p220) target = $region48
        $region47: #{tpu_custom_call.1} parent=35 // pred_region
          %223 = dma.done [#allocation6], 4096
        $region48: #{tpu_custom_call.1} parent=35 // pred_fallthru
          _
        %s224 = sand.u32 %s30, 1
        %s225 = scalar_lea.sflag [#allocation3], %s224
        %s226 = sand.u32 %s30, 1
        %s227 = smul.addr %s226, 128
        %s228 = scalar_lea.vmem [#allocation2], %s227
        %p229 = pneg %p43
        %p230 = pneg %p40
        %p231 = pneg %p64
        %p232 = pneg %p61
        %p233 = pneg %p85
        %p234 = pneg %p82
        %p235 = pneg %p106
        %p236 = pneg %p103
        %p237 = pneg %p132
        %p238 = pneg %p129
        %s239 = sand.u32 %s119, 1
        %s240 = scalar_lea.sflag [#allocation4], %s239
        %s241 = sand.u32 %s119, 1
        %s242 = smul.addr %s241, 64
        %s243 = scalar_lea.vmem [#allocation8], %s242
        %s244 = smul.u32 8, %s22
        %s245 = smul.u32 8, %s22
        %v246 = vld [vmem:[%s211] sm:$0xff]
        %v247 = vld [vmem:[%s211 + $0x8] sm:$0xff]
        %v248 = vld [vmem:[%s211 + $0x10] sm:$0xff]
        %v249 = vld [vmem:[%s211 + $0x18] sm:$0xff]
        %v250 = vld [vmem:[%s211 + $0x20] sm:$0xff]
        %v251 = vld [vmem:[%s211 + $0x28] sm:$0xff]
        %v252 = vld [vmem:[%s211 + $0x30] sm:$0xff]
        %v253 = vld [vmem:[%s211 + $0x38] sm:$0xff]
        %v254 = vld [vmem:[%s211 + $0x40] sm:$0xff]
        %v255 = vld [vmem:[%s211 + $0x48] sm:$0xff]
        %v256 = vld [vmem:[%s211 + $0x50] sm:$0xff]
        %v257 = vld [vmem:[%s211 + $0x58] sm:$0xff]
        %v258 = vld [vmem:[%s211 + $0x60] sm:$0xff]
        %v259 = vld [vmem:[%s211 + $0x68] sm:$0xff]
        %v260 = vld [vmem:[%s211 + $0x70] sm:$0xff]
        %v261 = vld [vmem:[%s211 + $0x78] sm:$0xff]
        %v262 = vadd.f32 %v246, %v247
        %263 = vadd.xlane.f32.xlu0 %v262
        %v264 = vpop.xlane.xlu0 %263
        %v265 = vadd.f32 %v248, %v249
        %266 = vadd.xlane.f32.xlu0 %v265
        %v267 = vpop.xlane.xlu0 %266
        %v268 = vadd.f32 %v250, %v251
        %269 = vadd.xlane.f32.xlu0 %v268
        %v270 = vpop.xlane.xlu0 %269
        %v271 = vadd.f32 %v252, %v253
        %272 = vadd.xlane.f32.xlu0 %v271
        %v273 = vpop.xlane.xlu0 %272
        %v274 = vadd.f32 %v254, %v255
        %275 = vadd.xlane.f32.xlu0 %v274
        %v276 = vpop.xlane.xlu0 %275
        %v277 = vadd.f32 %v256, %v257
        %278 = vadd.xlane.f32.xlu0 %v277
        %v279 = vpop.xlane.xlu0 %278
        %v280 = vadd.f32 %v258, %v259
        %281 = vadd.xlane.f32.xlu0 %v280
        %v282 = vpop.xlane.xlu0 %281
        %v283 = vadd.f32 %v260, %v261
        %284 = vadd.xlane.f32.xlu0 %v283
        %v285 = vpop.xlane.xlu0 %284
        %v286 = vrcp.pop 256.0
        %v287 = vmul.f32 %v264, %v286
        %v288 = vmul.f32 %v267, %v286
        %v289 = vmul.f32 %v270, %v286
        %v290 = vmul.f32 %v273, %v286
        %v291 = vmul.f32 %v276, %v286
        %v292 = vmul.f32 %v279, %v286
        %v293 = vmul.f32 %v282, %v286
        %v294 = vmul.f32 %v285, %v286
        %v295 = vsub.f32 %v246, %v287
        %v296 = vsub.f32 %v247, %v287
        %v297 = vsub.f32 %v248, %v288
        %v298 = vsub.f32 %v249, %v288
        %v299 = vsub.f32 %v250, %v289
        %v300 = vsub.f32 %v251, %v289
        %v301 = vsub.f32 %v252, %v290
        %v302 = vsub.f32 %v253, %v290
        %v303 = vsub.f32 %v254, %v291
        %v304 = vsub.f32 %v255, %v291
        %v305 = vsub.f32 %v256, %v292
        %v306 = vsub.f32 %v257, %v292
        %v307 = vsub.f32 %v258, %v293
        %v308 = vsub.f32 %v259, %v293
        %v309 = vsub.f32 %v260, %v294
        %v310 = vsub.f32 %v261, %v294
        %v311 = vmul.f32 %v295, %v295
        %v312 = vmul.f32 %v296, %v296
        %v313 = vmul.f32 %v297, %v297
        %v314 = vmul.f32 %v298, %v298
        %v315 = vmul.f32 %v299, %v299
        %v316 = vmul.f32 %v300, %v300
        %v317 = vmul.f32 %v301, %v301
        %v318 = vmul.f32 %v302, %v302
        %v319 = vmul.f32 %v303, %v303
        %v320 = vmul.f32 %v304, %v304
        %v321 = vmul.f32 %v305, %v305
        %v322 = vmul.f32 %v306, %v306
        %v323 = vmul.f32 %v307, %v307
        %v324 = vmul.f32 %v308, %v308
        %v325 = vmul.f32 %v309, %v309
        %v326 = vmul.f32 %v310, %v310
        %v327 = vadd.f32 %v311, %v312
        %328 = vadd.xlane.f32.xlu0 %v327
        %v329 = vpop.xlane.xlu0 %328
        %v330 = vadd.f32 %v313, %v314
        %331 = vadd.xlane.f32.xlu0 %v330
        %v332 = vpop.xlane.xlu0 %331
        %v333 = vadd.f32 %v315, %v316
        %334 = vadd.xlane.f32.xlu0 %v333
        %v335 = vpop.xlane.xlu0 %334
        %v336 = vadd.f32 %v317, %v318
        %337 = vadd.xlane.f32.xlu0 %v336
        %v338 = vpop.xlane.xlu0 %337
        %v339 = vadd.f32 %v319, %v320
        %340 = vadd.xlane.f32.xlu0 %v339
        %v341 = vpop.xlane.xlu0 %340
        %v342 = vadd.f32 %v321, %v322
        %343 = vadd.xlane.f32.xlu0 %v342
        %v344 = vpop.xlane.xlu0 %343
        %v345 = vadd.f32 %v323, %v324
        %346 = vadd.xlane.f32.xlu0 %v345
        %v347 = vpop.xlane.xlu0 %346
        %v348 = vadd.f32 %v325, %v326
        %349 = vadd.xlane.f32.xlu0 %v348
        %v350 = vpop.xlane.xlu0 %349
        %v351 = vmul.f32 %v329, %v286
        %v352 = vmul.f32 %v332, %v286
        %v353 = vmul.f32 %v335, %v286
        %v354 = vmul.f32 %v338, %v286
        %v355 = vmul.f32 %v341, %v286
        %v356 = vmul.f32 %v344, %v286
        %v357 = vmul.f32 %v347, %v286
        %v358 = vmul.f32 %v350, %v286
        %v359 = vadd.f32 %v351, 1e-05
        %v360 = vadd.f32 %v352, 1e-05
        %v361 = vadd.f32 %v353, 1e-05
        %v362 = vadd.f32 %v354, 1e-05
        %v363 = vadd.f32 %v355, 1e-05
        %v364 = vadd.f32 %v356, 1e-05
        %v365 = vadd.f32 %v357, 1e-05
        %v366 = vadd.f32 %v358, 1e-05
        %v367 = vrsqrt.pop %v359
        %v368 = vrsqrt.pop %v360
        %v369 = vrsqrt.pop %v361
        %v370 = vrsqrt.pop %v362
        %v371 = vrsqrt.pop %v363
        %v372 = vrsqrt.pop %v364
        %v373 = vrsqrt.pop %v365
        %v374 = vrsqrt.pop %v366
        %v375 = vmul.f32 %v295, %v367
        %v376 = vmul.f32 %v296, %v367
        %v377 = vmul.f32 %v297, %v368
        %v378 = vmul.f32 %v298, %v368
        %v379 = vmul.f32 %v299, %v369
        %v380 = vmul.f32 %v300, %v369
        %v381 = vmul.f32 %v301, %v370
        %v382 = vmul.f32 %v302, %v370
        %v383 = vmul.f32 %v303, %v371
        %v384 = vmul.f32 %v304, %v371
        %v385 = vmul.f32 %v305, %v372
        %v386 = vmul.f32 %v306, %v372
        %v387 = vmul.f32 %v307, %v373
        %v388 = vmul.f32 %v308, %v373
        %v389 = vmul.f32 %v309, %v374
        %v390 = vmul.f32 %v310, %v374
        %v391 = vld [vmem:[#allocation5] sm:$0x3]
        %v393 = vlaneseq
        %v394 = vshrl.u32 %v393, 7
        %v395 = vsub.s32 0, %v394
        %v396 = vrot.slane %v391, %v395
        %v397 = vlaneseq
        %v398 = vshrl.u32 %v397, 7
        %v399 = vsub.s32 1, %v398
        %v400 = vrot.slane %v391, %v399
        %v403 = vmul.f32 %v375, %v396
        %v404 = vmul.f32 %v376, %v400
        %v405 = vmul.f32 %v377, %v396
        %v406 = vmul.f32 %v378, %v400
        %v407 = vmul.f32 %v379, %v396
        %v408 = vmul.f32 %v380, %v400
        %v409 = vmul.f32 %v381, %v396
        %v410 = vmul.f32 %v382, %v400
        %v411 = vmul.f32 %v383, %v396
        %v412 = vmul.f32 %v384, %v400
        %v413 = vmul.f32 %v385, %v396
        %v414 = vmul.f32 %v386, %v400
        %v415 = vmul.f32 %v387, %v396
        %v416 = vmul.f32 %v388, %v400
        %v417 = vmul.f32 %v389, %v396
        %v418 = vmul.f32 %v390, %v400
        %v419 = vld [vmem:[%s2] sm:$0x3]
        %v421 = vlaneseq
        %v422 = vshrl.u32 %v421, 7
        %v423 = vsub.s32 0, %v422
        %v424 = vrot.slane %v419, %v423
        %v425 = vlaneseq
        %v426 = vshrl.u32 %v425, 7
        %v427 = vsub.s32 1, %v426
        %v428 = vrot.slane %v419, %v427
        %v431 = vadd.f32 %v403, %v424
        %v432 = vadd.f32 %v404, %v428
        %v433 = vadd.f32 %v405, %v424
        %v434 = vadd.f32 %v406, %v428
        %v435 = vadd.f32 %v407, %v424
        %v436 = vadd.f32 %v408, %v428
        %v437 = vadd.f32 %v409, %v424
        %v438 = vadd.f32 %v410, %v428
        %v439 = vadd.f32 %v411, %v424
        %v440 = vadd.f32 %v412, %v428
        %v441 = vadd.f32 %v413, %v424
        %v442 = vadd.f32 %v414, %v428
        %v443 = vadd.f32 %v415, %v424
        %v444 = vadd.f32 %v416, %v428
        %v445 = vadd.f32 %v417, %v424
        %v446 = vadd.f32 %v418, %v428
        %v447 = vld [vmem:[#allocation7] sm:$0xff]
        %v448 = vld [vmem:[#allocation7 + $0x8] sm:$0xff]
        %v449 = vld [vmem:[#allocation7 + $0x10] sm:$0xff]
        %v450 = vld [vmem:[#allocation7 + $0x18] sm:$0xff]
        %v451 = vld [vmem:[#allocation7 + $0x20] sm:$0xff]
        %v452 = vld [vmem:[#allocation7 + $0x28] sm:$0xff]
        %v453 = vld [vmem:[#allocation7 + $0x30] sm:$0xff]
        %v454 = vld [vmem:[#allocation7 + $0x38] sm:$0xff]
        %v455 = vld [vmem:[#allocation7 + $0x40] sm:$0xff]
        %v456 = vld [vmem:[#allocation7 + $0x48] sm:$0xff]
        %v457 = vld [vmem:[#allocation7 + $0x50] sm:$0xff]
        %v458 = vld [vmem:[#allocation7 + $0x58] sm:$0xff]
        %v459 = vld [vmem:[#allocation7 + $0x60] sm:$0xff]
        %v460 = vld [vmem:[#allocation7 + $0x68] sm:$0xff]
        %v461 = vld [vmem:[#allocation7 + $0x70] sm:$0xff]
        %v462 = vld [vmem:[#allocation7 + $0x78] sm:$0xff]
        %v463 = vld [vmem:[#allocation7 + $0x80] sm:$0xff]
        %v464 = vld [vmem:[#allocation7 + $0x88] sm:$0xff]
        %v465 = vld [vmem:[#allocation7 + $0x90] sm:$0xff]
        %v466 = vld [vmem:[#allocation7 + $0x98] sm:$0xff]
        %v467 = vld [vmem:[#allocation7 + $0xa0] sm:$0xff]
        %v468 = vld [vmem:[#allocation7 + $0xa8] sm:$0xff]
        %v469 = vld [vmem:[#allocation7 + $0xb0] sm:$0xff]
        %v470 = vld [vmem:[#allocation7 + $0xb8] sm:$0xff]
        %v471 = vld [vmem:[#allocation7 + $0xc0] sm:$0xff]
        %v472 = vld [vmem:[#allocation7 + $0xc8] sm:$0xff]
        %v473 = vld [vmem:[#allocation7 + $0xd0] sm:$0xff]
        %v474 = vld [vmem:[#allocation7 + $0xd8] sm:$0xff]
        %v475 = vld [vmem:[#allocation7 + $0xe0] sm:$0xff]
        %v476 = vld [vmem:[#allocation7 + $0xe8] sm:$0xff]
        %v477 = vld [vmem:[#allocation7 + $0xf0] sm:$0xff]
        %v478 = vld [vmem:[#allocation7 + $0xf8] sm:$0xff]
        %479 = vmatprep.subr.mxu0 0.0
        %480 = vmatpush1.msra.mxu0 %v462
        %481 = vmatprep.subr.mxu0 0.0
        %482 = vmatpush1.msra.mxu0 %v461
        %483 = vmatprep.subr.mxu0 0.0
        %484 = vmatpush1.msra.mxu0 %v460
        %485 = vmatprep.subr.mxu0 0.0
        %486 = vmatpush1.msra.mxu0 %v459
        %487 = vmatprep.subr.mxu0 0.0
        %488 = vmatpush1.msra.mxu0 %v458
        %489 = vmatprep.subr.mxu0 0.0
        %490 = vmatpush1.msra.mxu0 %v457
        %491 = vmatprep.subr.mxu0 0.0
        %492 = vmatpush1.msra.mxu0 %v456
        %493 = vmatprep.subr.mxu0 0.0
        %494 = vmatpush1.msra.mxu0 %v455
        %495 = vmatprep.subr.mxu0 0.0
        %496 = vmatpush1.msra.mxu0 %v454
        %497 = vmatprep.subr.mxu0 0.0
        %498 = vmatpush1.msra.mxu0 %v453
        %499 = vmatprep.subr.mxu0 0.0
        %500 = vmatpush1.msra.mxu0 %v452
        %501 = vmatprep.subr.mxu0 0.0
        %502 = vmatpush1.msra.mxu0 %v451
        %503 = vmatprep.subr.mxu0 0.0
        %504 = vmatpush1.msra.mxu0 %v450
        %505 = vmatprep.subr.mxu0 0.0
        %506 = vmatpush1.msra.mxu0 %v449
        %507 = vmatprep.subr.mxu0 0.0
        %508 = vmatpush1.msra.mxu0 %v448
        %509 = vmatprep.subr.mxu0 0.0
        %510 = vmatpush1.msra.mxu0 %v447
        %511 = vmatprep.subr.mxu0 0.0
        %512 = vmatpush2.msra.mxu0 %v478
        %513 = vmatprep.subr.mxu0 0.0
        %514 = vmatpush2.msra.mxu0 %v477
        %515 = vmatprep.subr.mxu0 0.0
        %516 = vmatpush2.msra.mxu0 %v476
        %517 = vmatprep.subr.mxu0 0.0
        %518 = vmatpush2.msra.mxu0 %v475
        %519 = vmatprep.subr.mxu0 0.0
        %520 = vmatpush2.msra.mxu0 %v474
        %521 = vmatprep.subr.mxu0 0.0
        %522 = vmatpush2.msra.mxu0 %v473
        %523 = vmatprep.subr.mxu0 0.0
        %524 = vmatpush2.msra.mxu0 %v472
        %525 = vmatprep.subr.mxu0 0.0
        %526 = vmatpush2.msra.mxu0 %v471
        %527 = vmatprep.subr.mxu0 0.0
        %528 = vmatpush2.msra.mxu0 %v470
        %529 = vmatprep.subr.mxu0 0.0
        %530 = vmatpush2.msra.mxu0 %v469
        %531 = vmatprep.subr.mxu0 0.0
        %532 = vmatpush2.msra.mxu0 %v468
        %533 = vmatprep.subr.mxu0 0.0
        %534 = vmatpush2.msra.mxu0 %v467
        %535 = vmatprep.subr.mxu0 0.0
        %536 = vmatpush2.msra.mxu0 %v466
        %537 = vmatprep.subr.mxu0 0.0
        %538 = vmatpush2.msra.mxu0 %v465
        %539 = vmatprep.subr.mxu0 0.0
        %540 = vmatpush2.msra.mxu0 %v464
        %541 = vmatprep.subr.mxu0 0.0
        %542 = vmatpush2.msra.mxu0 %v463
        %543 = vmatprep.mubr.f32.mxu0 %v432
        %544 = vmatmul.mubr.f32.gmra.mxu0 %v431
        %v545 = vpop.f32.mrf.mxu0
        %v546 = vadd.f32 0.0, %v545
        %v547 = vpop.f32.mrf.mxu0
        %548 = vmatprep.mubr.f32.mxu0 %v434
        %549 = vmatmul.mubr.f32.gmra.mxu0 %v433
        %v550 = vpop.f32.mrf.mxu0
        %v551 = vadd.f32 0.0, %v550
        %v552 = vpop.f32.mrf.mxu0
        %553 = vmatprep.mubr.f32.mxu0 %v436
        %554 = vmatmul.mubr.f32.gmra.mxu0 %v435
        %v555 = vpop.f32.mrf.mxu0
        %v556 = vadd.f32 0.0, %v555
        %v557 = vpop.f32.mrf.mxu0
        %558 = vmatprep.mubr.f32.mxu0 %v438
        %559 = vmatmul.mubr.f32.gmra.mxu0 %v437
        %v560 = vpop.f32.mrf.mxu0
        %v561 = vadd.f32 0.0, %v560
        %v562 = vpop.f32.mrf.mxu0
        %563 = vmatprep.mubr.f32.mxu0 %v440
        %564 = vmatmul.mubr.f32.gmra.mxu0 %v439
        %v565 = vpop.f32.mrf.mxu0
        %v566 = vadd.f32 0.0, %v565
        %v567 = vpop.f32.mrf.mxu0
        %568 = vmatprep.mubr.f32.mxu0 %v442
        %569 = vmatmul.mubr.f32.gmra.mxu0 %v441
        %v570 = vpop.f32.mrf.mxu0
        %v571 = vadd.f32 0.0, %v570
        %v572 = vpop.f32.mrf.mxu0
        %573 = vmatprep.mubr.f32.mxu0 %v444
        %574 = vmatmul.mubr.f32.gmra.mxu0 %v443
        %v575 = vpop.f32.mrf.mxu0
        %v576 = vadd.f32 0.0, %v575
        %v577 = vpop.f32.mrf.mxu0
        %578 = vmatprep.mubr.f32.mxu0 %v446
        %579 = vmatmul.mubr.f32.gmra.mxu0 %v445
        %v580 = vpop.f32.mrf.mxu0
        %v581 = vadd.f32 0.0, %v580
        %v582 = vpop.f32.mrf.mxu0
        %583 = vdwg.mxu0
        %584 = vst [vmem:[%s243] sm:$0xff] %v546
        %585 = vst [vmem:[%s243 + $0x8] sm:$0xff] %v551
        %586 = vst [vmem:[%s243 + $0x10] sm:$0xff] %v556
        %587 = vst [vmem:[%s243 + $0x18] sm:$0xff] %v561
        %588 = vst [vmem:[%s243 + $0x20] sm:$0xff] %v566
        %589 = vst [vmem:[%s243 + $0x28] sm:$0xff] %v571
        %590 = vst [vmem:[%s243 + $0x30] sm:$0xff] %v576
        %591 = vst [vmem:[%s243 + $0x38] sm:$0xff] %v581
        %s592 = sand.u32 %s119, 1
        %s593 = scalar_lea.sflag [#allocation4], %s592
        %s594 = sand.u32 %s119, 1
        %s595 = smul.addr %s594, 64
        %s596 = scalar_lea.vmem [#allocation8], %s595
        // Predicated region
        $region49: #{tpu_custom_call.1} parent=35 // pred_check
          %p597 = pneg %p129
        $region50: #{tpu_custom_call.1} parent=35 // pred_check_branch
          %599 = sbr.rel (%p597) target = $region52
        $region51: #{tpu_custom_call.1} parent=35 // pred_region
          %s600 = smul.u32 8, %s22
          %s602 = ssub.s32 1024, 1024
          %603 = vsyncadd %s593, %s602
          %s604 = smul.addr %s600, 128
          %s605 = scalar_lea.hbm %s4, %s604
          %s606 = sshll.u32 %s596, 4
          %s607 = int_to_ptr.vmem [resolvable:$true] %s606
          %612 = dma.vmem_to_hbm [thread:$0]  %s607, 1024, %s605, %s593, 128, 128, 8
        $region52: #{tpu_custom_call.1} parent=35 // pred_fallthru
          _
      $region36: #{tpu_custom_call.1} parent=5 // pred_fallthru
        _
      %p613 = scmp.le.s32.totalorder 2, %s17
      // Predicated region
      $region53: #{tpu_custom_call.1} parent=5 // pred_check
        %p614 = pneg %p613
      $region54: #{tpu_custom_call.1} parent=5 // pred_check_branch
        %616 = sbr.rel (%p614) target = $region56
      $region55: #{tpu_custom_call.1} parent=5 // pred_region
        %s617 = ssub.s32 %s17, 2
        // Predicated region
        $region57: #{tpu_custom_call.1} parent=55 // pred_check
          %p618 = pneg %p135
        $region58: #{tpu_custom_call.1} parent=55 // pred_check_branch
          %620 = sbr.rel (%p618) target = $region60
        $region59: #{tpu_custom_call.1} parent=55 // pred_region
          %s621 = sand.u32 %s120, 1
          %s622 = scalar_lea.sflag [#allocation4], %s621
          %s623 = sand.u32 %s120, 1
          %s624 = smul.addr %s623, 64
          %s625 = scalar_lea.vmem [#allocation8], %s624
          %626 = dma.done %s622, 1024
        $region60: #{tpu_custom_call.1} parent=55 // pred_fallthru
          _
      $region56: #{tpu_custom_call.1} parent=5 // pred_fallthru
        _
    $region6: #{tpu_custom_call.1} parent=1 // loop_footer
      %s21 = sadd.s32 1, %s17
    $region7: #{tpu_custom_call.1} parent=1 // loop_footer_branch
      %16 = sbr.rel target = $region3
    $region8: #{tpu_custom_call.1} parent=1 // loop_exit
      _
    %627 = vsyncpa [#allocation3], 1
    %s628 = scalar_lea.sflag [#allocation3], 1
    %629 = vsyncpa %s628, 1
    %630 = vsyncpa [#allocation6], 1
    %631 = vsyncpa [#allocation4], 1
    %s632 = scalar_lea.sflag [#allocation4], 1
    %633 = vsyncpa %s632, 1

</llo_original>
